<compile_context>
chip_gen: v6e
topology: v6e:2x2x1
jax: 0.10.0
libtpu: 0.0.40
codegen_flags: <defaults>
</compile_context>

<pallas_src>
import functools

import jax
import jax.numpy as jnp
import numpy as np
from jax.experimental import pallas as pl
from jax.experimental.pallas import tpu as pltpu


def _diag_gaussian_kernel(eps_ref, loc_ref, log_scale_ref, z_ref, logp_ref, *, d):
    """One batch tile: reparameterized sample + log-prob reduction.

    eps_ref:       (TILE_N, D)
    loc_ref:       (1, D)   pinned, broadcast over batch
    log_scale_ref: (1, D)   pinned, broadcast over batch
    z_ref:         (TILE_N, D)
    logp_ref:      (TILE_N, 1)
    """
    eps = eps_ref[...].astype(jnp.float32)
    loc = loc_ref[...].astype(jnp.float32)
    log_scale = log_scale_ref[...].astype(jnp.float32)

    # z = loc + exp(log_scale) * eps      (VPU/EUP elementwise, broadcast over rows)
    z = loc + jnp.exp(log_scale) * eps
    z_ref[...] = z.astype(z_ref.dtype)

    # log_p = -0.5*d*log(2*pi) - sum(log_scale) - 0.5 * sum_j eps_j^2
    # sum(log_scale) is batch-independent -> one (1, D) lane reduction per tile
    # instead of a materialized (TILE_N, D) broadcast-add temporary.
    const = np.float32(-0.5 * d * np.log(2.0 * np.pi))
    sum_ls = jnp.sum(log_scale, axis=-1, keepdims=True)              # (1, 1)
    sq = jnp.sum(eps * eps, axis=-1, keepdims=True)                  # (TILE_N, 1)
    logp_ref[...] = (const - sum_ls) - 0.5 * sq


def _round_up(x, m):
    return ((x + m - 1) // m) * m


def diag_gaussian_forward(eps_flat, loc_flat, log_scale_flat, *, tile_n=512):
    """eps_flat: (N, D); loc_flat, log_scale_flat: (1, D). Returns (z, log_p)."""
    N, D = eps_flat.shape

    # Tile size: biggest that fits comfortably; clamp for tiny batches
    # (second-to-last block dim must be a multiple of 8).
    tile_n = min(tile_n, _round_up(N, 8))
    tile_n = max(tile_n, 8)
    n_pad = _round_up(N, tile_n)

    if n_pad != N:
        eps_p = jnp.pad(eps_flat, ((0, n_pad - N), (0, 0)))
    else:
        eps_p = eps_flat

    kernel = functools.partial(_diag_gaussian_kernel, d=float(D))

    z, logp = pl.pallas_call(
        kernel,
        grid=(n_pad // tile_n,),
        in_specs=[
            pl.BlockSpec((tile_n, D), lambda i: (i, 0)),   # eps: tiled over batch
            pl.BlockSpec((1, D), lambda i: (0, 0)),        # loc: pinned
            pl.BlockSpec((1, D), lambda i: (0, 0)),        # log_scale: pinned
        ],
        out_specs=(
            pl.BlockSpec((tile_n, D), lambda i: (i, 0)),   # z
            pl.BlockSpec((tile_n, 1), lambda i: (i, 0)),   # log_p
        ),
        out_shape=(
            jax.ShapeDtypeStruct((n_pad, D), eps_flat.dtype),
            jax.ShapeDtypeStruct((n_pad, 1), jnp.float32),
        ),
        compiler_params=pltpu.CompilerParams(
            dimension_semantics=("parallel",),             # shard batch tiles on v7x megacore
        ),
    )(eps_p, loc_flat, log_scale_flat)

    return z[:N], logp[:N, 0]


def diag_gaussian(eps, loc, log_scale):
    """eps: (N, *shape); loc, log_scale: (1, *shape). Mirrors DiagGaussian.forward
    (temperature=None), with eps supplied externally for determinism."""
    # TODO(synk): torch.randn is drawn inside forward(); here the standard-normal
    # noise `eps` is passed in explicitly (host-side jax.random) so the kernel is
    # deterministic and testable.
    N = eps.shape[0]
    event_shape = eps.shape[1:]
    D = int(np.prod(event_shape))
    z_flat, log_p = diag_gaussian_forward(
        eps.reshape(N, D), loc.reshape(1, D), log_scale.reshape(1, D)
    )
    return z_flat.reshape((N,) + event_shape), log_p


if __name__ == "__main__":
    # Module config: DiagGaussian(shape=(4, 16, 16)), num_samples=2
    event_shape = (4, 16, 16)
    num_samples = 2
    d = int(np.prod(event_shape))

    key = jax.random.PRNGKey(0)
    k_eps, k_loc, k_ls = jax.random.split(key, 3)

    # torch.randn equivalent (standard normal noise)
    eps = jax.random.normal(k_eps, (num_samples,) + event_shape, dtype=jnp.float32)
    # Parameters are zeros in __init__; use small deterministic values instead
    # to exercise the broadcast / exp / reduction paths.
    loc = 0.1 * jax.random.normal(k_loc, (1,) + event_shape, dtype=jnp.float32)
    log_scale = 0.05 * jax.random.normal(k_ls, (1,) + event_shape, dtype=jnp.float32)

    z, log_p = diag_gaussian(eps, loc, log_scale)
    z = jax.block_until_ready(z)
    log_p = jax.block_until_ready(log_p)

    # Pure-JAX reference check
    z_ref = loc + jnp.exp(log_scale) * eps
    log_p_ref = (
        -0.5 * d * np.log(2.0 * np.pi)
        - jnp.sum(log_scale + 0.5 * eps**2, axis=(1, 2, 3))
    )
    assert z.shape == (num_samples,) + event_shape
    assert log_p.shape == (num_samples,)
    np.testing.assert_allclose(np.asarray(z), np.asarray(z_ref), rtol=1e-5, atol=1e-5)
    np.testing.assert_allclose(
        np.asarray(log_p), np.asarray(log_p_ref), rtol=1e-5, atol=1e-3
    )

    print("KERNEL_OK")
</pallas_src>

<mosaic_0001>
module attributes {stable_mosaic.version = 11 : i64} {
  func.func @_diag_gaussian_kernel(%arg0: i32, %arg1: memref<8x1024xf32, #tpu.memory_space<vmem>>, %arg2: memref<1x1024xf32, #tpu.memory_space<vmem>>, %arg3: memref<1x1024xf32, #tpu.memory_space<vmem>>, %arg4: memref<8x1024xf32, #tpu.memory_space<vmem>>, %arg5: memref<8x1xf32, #tpu.memory_space<vmem>>) attributes {dimension_semantics = [#tpu.dimension_semantics<parallel>], iteration_bounds = array<i64: 1>, scalar_prefetch = 0 : i64, scratch_operands = 0 : i64, tpu.core_type = #tpu.core_type<tc>, window_params = [{transform_indices = @transform_0, window_bounds = array<i64: 8, 1024>}, {pipeline_mode = #tpu.pipeline_mode<synchronous>, transform_indices = @transform_1, window_bounds = array<i64: 1, 1024>}, {pipeline_mode = #tpu.pipeline_mode<synchronous>, transform_indices = @transform_2, window_bounds = array<i64: 1, 1024>}, {transform_indices = @transform_3, window_bounds = array<i64: 8, 1024>}, {transform_indices = @transform_4, window_bounds = array<i64: 8, 1>}]} {
    %c0 = arith.constant 0 : index
    %c0_0 = arith.constant 0 : index
    %0 = vector.load %arg1[%c0, %c0_0] : memref<8x1024xf32, #tpu.memory_space<vmem>>, vector<8x1024xf32>
    %c0_1 = arith.constant 0 : index
    %c0_2 = arith.constant 0 : index
    %1 = vector.load %arg2[%c0_1, %c0_2] : memref<1x1024xf32, #tpu.memory_space<vmem>>, vector<1x1024xf32>
    %c0_3 = arith.constant 0 : index
    %c0_4 = arith.constant 0 : index
    %2 = vector.load %arg3[%c0_3, %c0_4] : memref<1x1024xf32, #tpu.memory_space<vmem>>, vector<1x1024xf32>
    %3 = math.exp %2 : vector<1x1024xf32>
    %4 = vector.broadcast %3 : vector<1x1024xf32> to vector<8x1024xf32>
    %5 = arith.mulf %4, %0 : vector<8x1024xf32>
    %6 = vector.broadcast %1 : vector<1x1024xf32> to vector<8x1024xf32>
    %7 = arith.addf %6, %5 : vector<8x1024xf32>
    %c0_5 = arith.constant 0 : index
    %c0_6 = arith.constant 0 : index
    %8 = vector.load %arg4[%c0_5, %c0_6] : memref<8x1024xf32, #tpu.memory_space<vmem>>, vector<8x1024xf32>
    tpu.vector_store %arg4[%c0_5, %c0_6], %7 {strides = array<i32>} : memref<8x1024xf32, #tpu.memory_space<vmem>>, vector<8x1024xf32>,
    %cst = arith.constant dense<0.000000e+00> : vector<1xf32>
    %9 = vector.multi_reduction <add>, %2, %cst [1] : vector<1x1024xf32> to vector<1xf32>
    %10 = vector.shape_cast %9 : vector<1xf32> to vector<1x1xf32>
    %11 = arith.mulf %0, %0 : vector<8x1024xf32>
    %cst_7 = arith.constant dense<0.000000e+00> : vector<8xf32>
    %12 = vector.multi_reduction <add>, %11, %cst_7 [1] : vector<8x1024xf32> to vector<8xf32>
    %13 = vector.shape_cast %12 : vector<8xf32> to vector<8x1xf32>
    %cst_8 = arith.constant -940.993041 : f32
    %14 = vector.broadcast %cst_8 : f32 to vector<1x1xf32>
    %15 = arith.subf %14, %10 : vector<1x1xf32>
    %cst_9 = arith.constant 5.000000e-01 : f32
    %16 = vector.broadcast %cst_9 : f32 to vector<8x1xf32>
    %17 = arith.mulf %16, %13 : vector<8x1xf32>
    %18 = vector.broadcast %15 : vector<1x1xf32> to vector<8x1xf32>
    %19 = arith.subf %18, %17 : vector<8x1xf32>
    %c0_10 = arith.constant 0 : index
    %c0_11 = arith.constant 0 : index
    %20 = vector.load %arg5[%c0_10, %c0_11] : memref<8x1xf32, #tpu.memory_space<vmem>>, vector<8x1xf32>
    tpu.vector_store %arg5[%c0_10, %c0_11], %19 {strides = array<i32>} : memref<8x1xf32, #tpu.memory_space<vmem>>, vector<8x1xf32>,
    return
  }
  func.func @transform_0(%arg0: i32) -> (i32, i32) {
    %c0_i32 = arith.constant 0 : i32
    %c0_i32_0 = arith.constant 0 : i32
    return %arg0, %c0_i32 : i32, i32
  }
  func.func @transform_1(%arg0: i32) -> (i32, i32) {
    %c0_i32 = arith.constant 0 : i32
    %c0_i32_0 = arith.constant 0 : i32
    %c0_i32_1 = arith.constant 0 : i32
    return %c0_i32, %c0_i32_0 : i32, i32
  }
  func.func @transform_2(%arg0: i32) -> (i32, i32) {
    %c0_i32 = arith.constant 0 : i32
    %c0_i32_0 = arith.constant 0 : i32
    %c0_i32_1 = arith.constant 0 : i32
    return %c0_i32, %c0_i32_0 : i32, i32
  }
  func.func @transform_3(%arg0: i32) -> (i32, i32) {
    %c0_i32 = arith.constant 0 : i32
    %c0_i32_0 = arith.constant 0 : i32
    return %arg0, %c0_i32 : i32, i32
  }
  func.func @transform_4(%arg0: i32) -> (i32, i32) {
    %c0_i32 = arith.constant 0 : i32
    %c0_i32_0 = arith.constant 0 : i32
    return %arg0, %c0_i32 : i32, i32
  }
}

</mosaic_0001>

<llo_original>
// kernel: tpu_custom_call.1
$region0: #{tpu_custom_call.1}
  #allocation0 [shape = 'u32[]', space=smem, size = 0x4, offset = 0x4, fixed_abs, tag = 'smem constant byte address 0x4 - core index']
  #allocation1 [shape = 'u32[144,128]{1,0:T(1,128)}', space=vmem, size = 0x12000, scoped, tag = 'internal scratch']
  %s0 = inlined_call_operand.hbm [shape: f32[8,1024], index: 0, kind: input, shape index: {}]
  %s1 = inlined_call_operand.hbm [shape: f32[1,1024], index: 1, kind: input, shape index: {}]
  %s2 = inlined_call_operand.hbm [shape: f32[1,1024], index: 2, kind: input, shape index: {}]
  %s3 = inlined_call_operand.hbm [shape: f32[8,1024], index: 3, kind: output, shape index: {0}]
  %s4 = inlined_call_operand.vmem [shape: f32[8,1], index: 4, kind: output, shape index: {1}]
  %5 = xla_tuple %s3, %s4
  %s6 = sld [smem:[#allocation0]]
  $region42: #{tpu_custom_call.1} parent=0
    _
  %s8 = ssub.s32 1, %s6
  %s9 = scalar_select 0, %s8, %s6
  $region1: #{tpu_custom_call.1} parent=0
    #allocation2 [shape = 'u8[32768]{0}', space=vmem, size = 0x8000, scoped, tag = 'input window, operand 0, single buffered']
    #allocation3 [shape = 's32[1]{0}', space=sflag, size = 0x4, scoped, tag = 'scoped memory for tpu_custom_call.1']
    #allocation4 [shape = 's32[1]{0}', space=sflag, size = 0x4, scoped, tag = 'scoped memory for tpu_custom_call.1']
    #allocation5 [shape = 'u8[4096]{0}', space=vmem, size = 0x1000, scoped, tag = 'input window, operand 1, single buffered']
    #allocation6 [shape = 's32[1]{0}', space=sflag, size = 0x4, scoped, tag = 'scoped memory for tpu_custom_call.1']
    #allocation7 [shape = 'u8[4096]{0}', space=vmem, size = 0x1000, scoped, tag = 'input window, operand 2, single buffered']
    #allocation8 [shape = 'u8[32768]{0}', space=vmem, size = 0x8000, scoped, tag = 'output window, operand 0, single buffered']
    %10 = vsyncpa [#allocation3], 0
    %11 = vsyncpa [#allocation6], 0
    %12 = vsyncpa [#allocation4], 0
    // Predicated region
    $region2: #{tpu_custom_call.1} parent=1 // pred_check
      _
    $region3: #{tpu_custom_call.1} parent=1 // pred_check_branch
      %14 = sbr.rel (0) target = $region5
    $region4: #{tpu_custom_call.1} parent=1 // pred_region
      %s16 = ssub.s32 1024, 1024
      %17 = vsyncadd [#allocation3], %s16
      %s19 = sshll.u32 [#allocation2], 4
      %s20 = int_to_ptr.vmem [resolvable:$true] %s19
      %22 = dma.hbm_to_vmem [thread:$0]  %s0, 1024, %s20, [#allocation3]
    $region5: #{tpu_custom_call.1} parent=1 // pred_fallthru
      _
    // Predicated region
    $region6: #{tpu_custom_call.1} parent=1 // pred_check
      _
    $region7: #{tpu_custom_call.1} parent=1 // pred_check_branch
      %24 = sbr.rel (0) target = $region9
    $region8: #{tpu_custom_call.1} parent=1 // pred_region
      %s26 = ssub.s32 128, 128
      %27 = vsyncadd [#allocation6], %s26
      %s29 = sshll.u32 [#allocation5], 4
      %s30 = int_to_ptr.vmem [resolvable:$true] %s29
      %32 = dma.hbm_to_vmem [thread:$0]  %s1, 128, %s30, [#allocation6]
    $region9: #{tpu_custom_call.1} parent=1 // pred_fallthru
      _
    // Predicated region
    $region10: #{tpu_custom_call.1} parent=1 // pred_check
      _
    $region11: #{tpu_custom_call.1} parent=1 // pred_check_branch
      %34 = sbr.rel (0) target = $region13
    $region12: #{tpu_custom_call.1} parent=1 // pred_region
      %s36 = ssub.s32 128, 128
      %37 = vsyncadd [#allocation6], %s36
      %s39 = sshll.u32 [#allocation7], 4
      %s40 = int_to_ptr.vmem [resolvable:$true] %s39
      %42 = dma.hbm_to_vmem [thread:$0]  %s2, 128, %s40, [#allocation6]
    $region13: #{tpu_custom_call.1} parent=1 // pred_fallthru
      _
    // Predicated region
    $region14: #{tpu_custom_call.1} parent=1 // pred_check
      _
    $region15: #{tpu_custom_call.1} parent=1 // pred_check_branch
      %44 = sbr.rel (0) target = $region17
    $region16: #{tpu_custom_call.1} parent=1 // pred_region
      %45 = dma.done [#allocation3], 1024
    $region17: #{tpu_custom_call.1} parent=1 // pred_fallthru
      _
    // Predicated region
    $region18: #{tpu_custom_call.1} parent=1 // pred_check
      _
    $region19: #{tpu_custom_call.1} parent=1 // pred_check_branch
      %47 = sbr.rel (0) target = $region21
    $region20: #{tpu_custom_call.1} parent=1 // pred_region
      %48 = dma.done [#allocation6], 128
    $region21: #{tpu_custom_call.1} parent=1 // pred_fallthru
      _
    // Predicated region
    $region22: #{tpu_custom_call.1} parent=1 // pred_check
      _
    $region23: #{tpu_custom_call.1} parent=1 // pred_check_branch
      %50 = sbr.rel (0) target = $region25
    $region24: #{tpu_custom_call.1} parent=1 // pred_region
      %51 = dma.done [#allocation6], 128
    $region25: #{tpu_custom_call.1} parent=1 // pred_fallthru
      _
    %v52 = vld [vmem:[#allocation2] sm:$0xff]
    %v53 = vld [vmem:[#allocation2 + $0x8] sm:$0xff]
    %v54 = vld [vmem:[#allocation2 + $0x10] sm:$0xff]
    %v55 = vld [vmem:[#allocation2 + $0x18] sm:$0xff]
    %v56 = vld [vmem:[#allocation2 + $0x20] sm:$0xff]
    %v57 = vld [vmem:[#allocation2 + $0x28] sm:$0xff]
    %v58 = vld [vmem:[#allocation2 + $0x30] sm:$0xff]
    %v59 = vld [vmem:[#allocation2 + $0x38] sm:$0xff]
    %v60 = vld [vmem:[#allocation5] sm:$0xff]
    %v61 = vld [vmem:[#allocation7] sm:$0xff]
    %v62 = vmul.f32 %v61, 1.442695
    %v63 = vpow.pop %v62
    %v65 = vlaneseq
    %v66 = vshrl.u32 %v65, 7
    %v67 = vsub.s32 0, %v66
    %v68 = vrot.slane %v63, %v67
    %v69 = vlaneseq
    %v70 = vshrl.u32 %v69, 7
    %v71 = vsub.s32 1, %v70
    %v72 = vrot.slane %v63, %v71
    %v73 = vlaneseq
    %v74 = vshrl.u32 %v73, 7
    %v75 = vsub.s32 2, %v74
    %v76 = vrot.slane %v63, %v75
    %v77 = vlaneseq
    %v78 = vshrl.u32 %v77, 7
    %v79 = vsub.s32 3, %v78
    %v80 = vrot.slane %v63, %v79
    %v81 = vlaneseq
    %v82 = vshrl.u32 %v81, 7
    %v83 = vsub.s32 4, %v82
    %v84 = vrot.slane %v63, %v83
    %v85 = vlaneseq
    %v86 = vshrl.u32 %v85, 7
    %v87 = vsub.s32 5, %v86
    %v88 = vrot.slane %v63, %v87
    %v89 = vlaneseq
    %v90 = vshrl.u32 %v89, 7
    %v91 = vsub.s32 6, %v90
    %v92 = vrot.slane %v63, %v91
    %v93 = vlaneseq
    %v94 = vshrl.u32 %v93, 7
    %v95 = vsub.s32 7, %v94
    %v96 = vrot.slane %v63, %v95
    %v105 = vmul.f32 %v68, %v52
    %v106 = vmul.f32 %v72, %v53
    %v107 = vmul.f32 %v76, %v54
    %v108 = vmul.f32 %v80, %v55
    %v109 = vmul.f32 %v84, %v56
    %v110 = vmul.f32 %v88, %v57
    %v111 = vmul.f32 %v92, %v58
    %v112 = vmul.f32 %v96, %v59
    %v114 = vlaneseq
    %v115 = vshrl.u32 %v114, 7
    %v116 = vsub.s32 0, %v115
    %v117 = vrot.slane %v60, %v116
    %v118 = vlaneseq
    %v119 = vshrl.u32 %v118, 7
    %v120 = vsub.s32 1, %v119
    %v121 = vrot.slane %v60, %v120
    %v122 = vlaneseq
    %v123 = vshrl.u32 %v122, 7
    %v124 = vsub.s32 2, %v123
    %v125 = vrot.slane %v60, %v124
    %v126 = vlaneseq
    %v127 = vshrl.u32 %v126, 7
    %v128 = vsub.s32 3, %v127
    %v129 = vrot.slane %v60, %v128
    %v130 = vlaneseq
    %v131 = vshrl.u32 %v130, 7
    %v132 = vsub.s32 4, %v131
    %v133 = vrot.slane %v60, %v132
    %v134 = vlaneseq
    %v135 = vshrl.u32 %v134, 7
    %v136 = vsub.s32 5, %v135
    %v137 = vrot.slane %v60, %v136
    %v138 = vlaneseq
    %v139 = vshrl.u32 %v138, 7
    %v140 = vsub.s32 6, %v139
    %v141 = vrot.slane %v60, %v140
    %v142 = vlaneseq
    %v143 = vshrl.u32 %v142, 7
    %v144 = vsub.s32 7, %v143
    %v145 = vrot.slane %v60, %v144
    %v154 = vadd.f32 %v117, %v105
    %v155 = vadd.f32 %v121, %v106
    %v156 = vadd.f32 %v125, %v107
    %v157 = vadd.f32 %v129, %v108
    %v158 = vadd.f32 %v133, %v109
    %v159 = vadd.f32 %v137, %v110
    %v160 = vadd.f32 %v141, %v111
    %v161 = vadd.f32 %v145, %v112
    %162 = vst [vmem:[#allocation8] sm:$0xff] %v154
    %163 = vst [vmem:[#allocation8 + $0x8] sm:$0xff] %v155
    %164 = vst [vmem:[#allocation8 + $0x10] sm:$0xff] %v156
    %165 = vst [vmem:[#allocation8 + $0x18] sm:$0xff] %v157
    %166 = vst [vmem:[#allocation8 + $0x20] sm:$0xff] %v158
    %167 = vst [vmem:[#allocation8 + $0x28] sm:$0xff] %v159
    %168 = vst [vmem:[#allocation8 + $0x30] sm:$0xff] %v160
    %169 = vst [vmem:[#allocation8 + $0x38] sm:$0xff] %v161
    %v171 = vlaneseq
    %v172 = vshrl.u32 %v171, 7
    %v173 = vsub.s32 0, %v172
    %v174 = vrot.slane %v61, %v173
    %v175 = vlaneseq
    %v176 = vshrl.u32 %v175, 7
    %v177 = vsub.s32 1, %v176
    %v178 = vrot.slane %v61, %v177
    %v179 = vlaneseq
    %v180 = vshrl.u32 %v179, 7
    %v181 = vsub.s32 2, %v180
    %v182 = vrot.slane %v61, %v181
    %v183 = vlaneseq
    %v184 = vshrl.u32 %v183, 7
    %v185 = vsub.s32 3, %v184
    %v186 = vrot.slane %v61, %v185
    %v187 = vlaneseq
    %v188 = vshrl.u32 %v187, 7
    %v189 = vsub.s32 4, %v188
    %v190 = vrot.slane %v61, %v189
    %v191 = vlaneseq
    %v192 = vshrl.u32 %v191, 7
    %v193 = vsub.s32 5, %v192
    %v194 = vrot.slane %v61, %v193
    %v195 = vlaneseq
    %v196 = vshrl.u32 %v195, 7
    %v197 = vsub.s32 6, %v196
    %v198 = vrot.slane %v61, %v197
    %v199 = vlaneseq
    %v200 = vshrl.u32 %v199, 7
    %v201 = vsub.s32 7, %v200
    %v202 = vrot.slane %v61, %v201
    %vm211 = vcmask 1040384
    %v212 = vsel %vm211, %v174, 0.0
    %v213 = vsel %vm211, %v178, 0.0
    %v214 = vadd.f32 %v212, %v213
    %v215 = vsel %vm211, %v182, 0.0
    %v216 = vadd.f32 %v214, %v215
    %v217 = vsel %vm211, %v186, 0.0
    %v218 = vadd.f32 %v216, %v217
    %v219 = vsel %vm211, %v190, 0.0
    %v220 = vadd.f32 %v218, %v219
    %v221 = vsel %vm211, %v194, 0.0
    %v222 = vadd.f32 %v220, %v221
    %v223 = vsel %vm211, %v198, 0.0
    %v224 = vadd.f32 %v222, %v223
    %v225 = vsel %vm211, %v202, 0.0
    %v226 = vadd.f32 %v224, %v225
    %227 = vadd.xlane.f32.xlu0 %v226
    %v228 = vpop.xlane.xlu0 %227
    %v229 = vmul.f32 %v52, %v52
    %v230 = vmul.f32 %v53, %v53
    %v231 = vmul.f32 %v54, %v54
    %v232 = vmul.f32 %v55, %v55
    %v233 = vmul.f32 %v56, %v56
    %v234 = vmul.f32 %v57, %v57
    %v235 = vmul.f32 %v58, %v58
    %v236 = vmul.f32 %v59, %v59
    %v237 = vadd.f32 %v229, %v230
    %v238 = vadd.f32 %v237, %v231
    %v239 = vadd.f32 %v238, %v232
    %v240 = vadd.f32 %v239, %v233
    %v241 = vadd.f32 %v240, %v234
    %v242 = vadd.f32 %v241, %v235
    %v243 = vadd.f32 %v242, %v236
    %244 = vadd.xlane.f32.xlu0 %v243
    %v245 = vpop.xlane.xlu0 %244
    %v246 = vsub.f32 -940.99304, %v228
    %v247 = vmul.f32 %v245, 0.5
    %v248 = vlaneseq
    %v249 = vshrl.u32 %v248, 7
    %v250 = vsub.s32 0, %v249
    %v251 = vrot.slane %v246, %v250
    %v252 = vsub.f32 %v251, %v247
    %vm253 = vcmask 7168
    %254 = vst.msk [vmem:[%s4] sm:$0xff] %vm253, %v252
    // Predicated region
    $region26: #{tpu_custom_call.1} parent=1 // pred_check
      _
    $region27: #{tpu_custom_call.1} parent=1 // pred_check_branch
      %256 = sbr.rel (0) target = $region29
    $region28: #{tpu_custom_call.1} parent=1 // pred_region
      %s258 = ssub.s32 1024, 1024
      %259 = vsyncadd [#allocation4], %s258
      %s261 = sshll.u32 [#allocation8], 4
      %s262 = int_to_ptr.vmem [resolvable:$true] %s261
      %264 = dma.vmem_to_hbm [thread:$0]  %s262, 1024, %s3, [#allocation4]
    $region29: #{tpu_custom_call.1} parent=1 // pred_fallthru
      _
    // Predicated region
    $region30: #{tpu_custom_call.1} parent=1 // pred_check
      _
    $region31: #{tpu_custom_call.1} parent=1 // pred_check_branch
      %266 = sbr.rel (0) target = $region33
    $region32: #{tpu_custom_call.1} parent=1 // pred_region
      _
    $region33: #{tpu_custom_call.1} parent=1 // pred_fallthru
      _
    // Predicated region
    $region34: #{tpu_custom_call.1} parent=1 // pred_check
      _
    $region35: #{tpu_custom_call.1} parent=1 // pred_check_branch
      %268 = sbr.rel (0) target = $region37
    $region36: #{tpu_custom_call.1} parent=1 // pred_region
      %269 = dma.done [#allocation4], 1024
    $region37: #{tpu_custom_call.1} parent=1 // pred_fallthru
      _
    // Predicated region
    $region38: #{tpu_custom_call.1} parent=1 // pred_check
      _
    $region39: #{tpu_custom_call.1} parent=1 // pred_check_branch
      %271 = sbr.rel (0) target = $region41
    $region40: #{tpu_custom_call.1} parent=1 // pred_region
      _
    $region41: #{tpu_custom_call.1} parent=1 // pred_fallthru
      _
    %272 = vsyncpa [#allocation3], 1
    %273 = vsyncpa [#allocation6], 1
    %274 = vsyncpa [#allocation4], 1

</llo_original>
